<compile_context>
chip_gen: v5e
topology: v5e:2x2
jax: 0.10.0
libtpu: 0.0.40
codegen_flags: <defaults>
</compile_context>

<pallas_src>
import jax
import jax.numpy as jnp
from jax.experimental import pallas as pl
from jax.experimental.pallas import tpu as pltpu


def _round_up(x, m):
    return (x + m - 1) // m * m


def _pick_row_tile(n_pad):
    # Prefer >=2 row tiles so the "parallel" axis can shard across v7x's 2 TCs,
    # capped at 512 rows per tile.
    target = max(8, min(512, n_pad // 2))
    for cand in (512, 256, 128, 64, 32, 16, 8):
        if cand <= target and n_pad % cand == 0:
            return cand
    return n_pad


def _pick_k_tile(n_pad):
    for cand in (2048, 1024, 512, 256, 128):
        if cand <= n_pad and n_pad % cand == 0:
            return cand
    return n_pad


# ----------------------------------------------------------------------------
# Kernel 1: fused encoder  HW2 = relu(adj @ (X @ W1) + b1) @ W2
#   grid = (row tiles [parallel], K tiles [arbitrary, last])
#   adj streamed as f32 tiles (cast to bf16 in-kernel); X@W1 recomputed per K tile
#   with W1 resident; bias + relu + @W2 only in the last-K finalize.
# ----------------------------------------------------------------------------
def _encoder_kernel(adj_ref, x_ref, w1_ref, b1_ref, w2_ref, o_ref, acc_ref):
    k = pl.program_id(1)

    @pl.when(k == 0)
    def _init():
        acc_ref[...] = jnp.zeros_like(acc_ref)

    # FW k-tile on the fly: (tk, f_in) @ (f_in, hidden), f32 MXU accumulation.
    fw = jnp.dot(
        x_ref[...].astype(jnp.bfloat16), w1_ref[...],
        preferred_element_type=jnp.float32,
    ).astype(jnp.bfloat16)

    acc_ref[...] += jnp.dot(
        adj_ref[...].astype(jnp.bfloat16), fw,
        preferred_element_type=jnp.float32,
    )

    @pl.when(k == pl.num_programs(1) - 1)
    def _finalize():
        h = jnp.maximum(acc_ref[...] + b1_ref[...], 0.0)
        o_ref[...] = jnp.dot(
            h.astype(jnp.bfloat16), w2_ref[...],
            preferred_element_type=jnp.float32,
        ).astype(o_ref.dtype)


def encoder_fused(adj, x, w1, b1, w2, *, tm, tk):
    n_pad = adj.shape[0]
    f_in = x.shape[1]
    hidden = w1.shape[1]
    cls_pad = w2.shape[1]
    n_row = n_pad // tm
    n_k = n_pad // tk

    flops = (2 * n_pad * n_pad * hidden            # adj @ FW
             + 2 * n_pad * f_in * hidden * n_row   # X @ W1 recompute per row tile
             + 2 * n_pad * hidden * cls_pad)       # H @ W2 finalize
    bytes_accessed = (4 * n_pad * n_pad            # adj (f32, read once)
                      + 4 * n_pad * f_in * n_row   # x re-streamed per row tile
                      + 2 * n_pad * cls_pad)       # HW2 output (bf16)

    return pl.pallas_call(
        _encoder_kernel,
        out_shape=jax.ShapeDtypeStruct((n_pad, cls_pad), jnp.bfloat16),
        grid_spec=pltpu.PrefetchScalarGridSpec(
            num_scalar_prefetch=0,
            grid=(n_row, n_k),
            in_specs=[
                pl.BlockSpec((tm, tk), lambda i, k: (i, k)),           # adj tile (f32)
                pl.BlockSpec((tk, f_in), lambda i, k: (k, 0)),         # x K tile
                pl.BlockSpec((f_in, hidden), lambda i, k: (0, 0)),     # W1 resident
                pl.BlockSpec((1, hidden), lambda i, k: (0, 0)),        # b1 resident
                pl.BlockSpec((hidden, cls_pad), lambda i, k: (0, 0)),  # W2 resident
            ],
            out_specs=pl.BlockSpec((tm, cls_pad), lambda i, k: (i, 0)),
            scratch_shapes=[pltpu.VMEM((tm, hidden), jnp.float32)],
        ),
        compiler_params=pltpu.CompilerParams(
            dimension_semantics=("parallel", "arbitrary"),
            vmem_limit_bytes=32 * 1024 * 1024,
        ),
        cost_estimate=pl.CostEstimate(
            flops=flops, transcendentals=0, bytes_accessed=bytes_accessed
        ),
    )(adj, x, w1, b1, w2)


# ----------------------------------------------------------------------------
# Kernel 2: gather-fused decoder  logits = adj[idx] @ HW2 + b2
#   Only the |idx| selected rows of adj are aggregated; K tiled with f32 accumulator.
# ----------------------------------------------------------------------------
def _decoder_kernel(adj_ref, hw2_ref, b2_ref, o_ref, acc_ref):
    k = pl.program_id(0)

    @pl.when(k == 0)
    def _init():
        acc_ref[...] = jnp.zeros_like(acc_ref)

    acc_ref[...] += jnp.dot(
        adj_ref[...].astype(jnp.bfloat16), hw2_ref[...],
        preferred_element_type=jnp.float32,
    )

    @pl.when(k == pl.num_programs(0) - 1)
    def _finalize():
        o_ref[...] = acc_ref[...] + b2_ref[...]


def decoder_fused(adj_idx, hw2, b2, *, tk):
    m, n_pad = adj_idx.shape
    cls_pad = hw2.shape[1]
    return pl.pallas_call(
        _decoder_kernel,
        out_shape=jax.ShapeDtypeStruct((m, cls_pad), jnp.float32),
        grid_spec=pltpu.PrefetchScalarGridSpec(
            num_scalar_prefetch=0,
            grid=(n_pad // tk,),
            in_specs=[
                pl.BlockSpec((m, tk), lambda k: (0, k)),         # adj[idx] K tile (f32)
                pl.BlockSpec((tk, cls_pad), lambda k: (k, 0)),   # HW2 K tile
                pl.BlockSpec((1, cls_pad), lambda k: (0, 0)),    # b2 resident
            ],
            out_specs=pl.BlockSpec((m, cls_pad), lambda k: (0, 0)),
            scratch_shapes=[pltpu.VMEM((m, cls_pad), jnp.float32)],
        ),
        compiler_params=pltpu.CompilerParams(
            dimension_semantics=("arbitrary",),
            vmem_limit_bytes=32 * 1024 * 1024,
        ),
    )(adj_idx, hw2, b2)


# ----------------------------------------------------------------------------
# NCModel.forward(x, adj, idx) = decoder(encoder(x, adj), adj)[idx]
# ----------------------------------------------------------------------------
def nc_model_forward(x, adj, idx, params):
    n, _ = x.shape
    nb_class = params["w2"].shape[1]

    # Node dim padded to a multiple of 128 only when needed (no-op otherwise);
    # class dim lane-padded to 128 so the HW2 / logits stores are lane-dense.
    n_pad = _round_up(n, 128)
    cls_pad = _round_up(nb_class, 128)
    tm = _pick_row_tile(n_pad)
    tk = _pick_k_tile(n_pad)

    if n_pad != n:
        adj_p = jnp.pad(adj, ((0, n_pad - n), (0, n_pad - n)))
        x_p = jnp.pad(x, ((0, n_pad - n), (0, 0)))
    else:
        adj_p, x_p = adj, x

    w1 = params["w1"].astype(jnp.bfloat16)
    b1 = params["b1"].astype(jnp.float32)
    w2 = jnp.pad(params["w2"], ((0, 0), (0, cls_pad - nb_class))).astype(jnp.bfloat16)
    b2 = jnp.pad(params["b2"], ((0, 0), (0, cls_pad - nb_class))).astype(jnp.float32)

    # Encoder mega-kernel: HW2 = relu(adj @ (X @ W1) + b1) @ W2
    hw2 = encoder_fused(adj_p, x_p, w1, b1, w2, tm=tm, tk=tk)   # [n_pad, cls_pad] bf16

    # Decoder (output[idx] gather fused): only |idx| adjacency rows are aggregated.
    n_idx = idx.shape[0]
    n_idx_pad = _round_up(max(n_idx, 8), 8)
    adj_idx = jnp.take(adj_p, idx, axis=0)                      # [n_idx, n_pad] f32
    if n_idx_pad != n_idx:
        adj_idx = jnp.pad(adj_idx, ((0, n_idx_pad - n_idx), (0, 0)))  # zero rows

    logits = decoder_fused(adj_idx, hw2, b2, tk=tk)             # [n_idx_pad, cls_pad] f32
    return logits[:n_idx, :nb_class]


# ----------------------------------------------------------------------------
# helpers for the demo
# ----------------------------------------------------------------------------
def _make_params(key, feat_dim, hidden_dim, nb_class):
    k1, k2 = jax.random.split(key)
    scale1 = 1.0 / jnp.sqrt(feat_dim)
    scale2 = 1.0 / jnp.sqrt(hidden_dim)
    return {
        "w1": jax.random.normal(k1, (feat_dim, hidden_dim), jnp.float32) * scale1,
        "b1": jnp.zeros((1, hidden_dim), jnp.float32),
        "w2": jax.random.normal(k2, (hidden_dim, nb_class), jnp.float32) * scale2,
        "b2": jnp.zeros((1, nb_class), jnp.float32),
    }


def _make_normalized_adj(key, n_nodes):
    a = (jax.random.uniform(key, (n_nodes, n_nodes)) < 0.1).astype(jnp.float32)
    a = jnp.maximum(a, a.T)
    a = a + jnp.eye(n_nodes, dtype=jnp.float32)
    deg = jnp.sum(a, axis=1, keepdims=True)
    return a / deg


def _reference_forward(x, adj, idx, params):
    h = jnp.maximum(adj @ (x @ params["w1"]) + params["b1"], 0.0)
    out = adj @ (h @ params["w2"]) + params["b2"]
    return out[idx]


if __name__ == "__main__":
    n_nodes, feat_dim, hidden_dim, nb_class = 64, 16, 32, 4

    key = jax.random.PRNGKey(0)
    k_x, k_adj, k_p = jax.random.split(key, 3)

    x = jax.random.normal(k_x, (n_nodes, feat_dim), jnp.float32)
    adj = _make_normalized_adj(k_adj, n_nodes)
    idx = jnp.arange(8, dtype=jnp.int32)  # idx_train-style node subset
    params = _make_params(k_p, feat_dim, hidden_dim, nb_class)

    out = nc_model_forward(x, adj, idx, params)
    jax.block_until_ready(out)
    assert out.shape == (8, nb_class)

    # Sanity check vs. f32 reference (loose tolerance: bf16 matmul operands).
    ref = _reference_forward(x, adj, idx, params)
    assert float(jnp.max(jnp.abs(out - ref))) < 0.1

    print("KERNEL_OK")
</pallas_src>

<mosaic_0001>
module attributes {stable_mosaic.version = 11 : i64} {
  func.func @_encoder_kernel(%arg0: i32, %arg1: i32, %arg2: memref<64x128xf32, #tpu.memory_space<vmem>>, %arg3: memref<128x16xf32, #tpu.memory_space<vmem>>, %arg4: memref<16x32xbf16, #tpu.memory_space<vmem>>, %arg5: memref<1x32xf32, #tpu.memory_space<vmem>>, %arg6: memref<32x128xbf16, #tpu.memory_space<vmem>>, %arg7: memref<64x128xbf16, #tpu.memory_space<vmem>>, %arg8: memref<64x32xf32, #tpu.memory_space<vmem>>) attributes {dimension_semantics = [#tpu.dimension_semantics<parallel>, #tpu.dimension_semantics<arbitrary>], iteration_bounds = array<i64: 2, 1>, scalar_prefetch = 0 : i64, scratch_operands = 1 : i64, tpu.core_type = #tpu.core_type<tc>, window_params = [{transform_indices = @transform_0, window_bounds = array<i64: 64, 128>}, {transform_indices = @transform_1, window_bounds = array<i64: 128, 16>}, {pipeline_mode = #tpu.pipeline_mode<synchronous>, transform_indices = @transform_2, window_bounds = array<i64: 16, 32>}, {pipeline_mode = #tpu.pipeline_mode<synchronous>, transform_indices = @transform_3, window_bounds = array<i64: 1, 32>}, {pipeline_mode = #tpu.pipeline_mode<synchronous>, transform_indices = @transform_4, window_bounds = array<i64: 32, 128>}, {transform_indices = @transform_5, window_bounds = array<i64: 64, 128>}]} {
    %c0_i32 = arith.constant 0 : i32
    %0 = arith.cmpi eq, %arg1, %c0_i32 : i32
    %1 = arith.extui %0 : i1 to i32
    %c0_i32_0 = arith.constant 0 : i32
    %2 = arith.cmpi ne, %1, %c0_i32_0 : i32
    scf.if %2 {
      %cst_13 = arith.constant 0.000000e+00 : f32
      %17 = vector.broadcast %cst_13 : f32 to vector<64x32xf32>
      %c0_14 = arith.constant 0 : index
      %c0_15 = arith.constant 0 : index
      %18 = vector.load %arg8[%c0_14, %c0_15] : memref<64x32xf32, #tpu.memory_space<vmem>>, vector<64x32xf32>
      tpu.vector_store %arg8[%c0_14, %c0_15], %17 {strides = array<i32>} : memref<64x32xf32, #tpu.memory_space<vmem>>, vector<64x32xf32>,
    } else {
    }
    %c0 = arith.constant 0 : index
    %c0_1 = arith.constant 0 : index
    %3 = vector.load %arg3[%c0, %c0_1] : memref<128x16xf32, #tpu.memory_space<vmem>>, vector<128x16xf32>
    %4 = arith.truncf %3 : vector<128x16xf32> to vector<128x16xbf16>
    %c0_2 = arith.constant 0 : index
    %c0_3 = arith.constant 0 : index
    %5 = vector.load %arg4[%c0_2, %c0_3] : memref<16x32xbf16, #tpu.memory_space<vmem>>, vector<16x32xbf16>
    %cst = arith.constant dense<0.000000e+00> : vector<128x32xf32>
    %6 = tpu.matmul %4, %5, %cst {dimension_numbers = #tpu.dot_dimension_numbers<[1], [0], [0], [1], [0, 0, 1, 1], [], []>} : vector<128x16xbf16>, vector<16x32xbf16>, vector<128x32xf32> -> vector<128x32xf32>
    %7 = arith.truncf %6 : vector<128x32xf32> to vector<128x32xbf16>
    %c0_4 = arith.constant 0 : index
    %c0_5 = arith.constant 0 : index
    %8 = vector.load %arg8[%c0_4, %c0_5] : memref<64x32xf32, #tpu.memory_space<vmem>>, vector<64x32xf32>
    %c0_6 = arith.constant 0 : index
    %c0_7 = arith.constant 0 : index
    %9 = vector.load %arg2[%c0_6, %c0_7] : memref<64x128xf32, #tpu.memory_space<vmem>>, vector<64x128xf32>
    %10 = arith.truncf %9 : vector<64x128xf32> to vector<64x128xbf16>
    %cst_8 = arith.constant dense<0.000000e+00> : vector<64x32xf32>
    %11 = tpu.matmul %10, %7, %cst_8 {dimension_numbers = #tpu.dot_dimension_numbers<[1], [0], [0], [1], [0, 0, 1, 1], [], []>} : vector<64x128xbf16>, vector<128x32xbf16>, vector<64x32xf32> -> vector<64x32xf32>
    %12 = arith.addf %8, %11 : vector<64x32xf32>
    %c0_9 = arith.constant 0 : index
    %c0_10 = arith.constant 0 : index
    %13 = vector.load %arg8[%c0_9, %c0_10] : memref<64x32xf32, #tpu.memory_space<vmem>>, vector<64x32xf32>
    tpu.vector_store %arg8[%c0_9, %c0_10], %12 {strides = array<i32>} : memref<64x32xf32, #tpu.memory_space<vmem>>, vector<64x32xf32>,
    %c0_i32_11 = arith.constant 0 : i32
    %14 = arith.cmpi eq, %arg1, %c0_i32_11 : i32
    %15 = arith.extui %14 : i1 to i32
    %c0_i32_12 = arith.constant 0 : i32
    %16 = arith.cmpi ne, %15, %c0_i32_12 : i32
    scf.if %16 {
      %c0_13 = arith.constant 0 : index
      %c0_14 = arith.constant 0 : index
      %17 = vector.load %arg8[%c0_13, %c0_14] : memref<64x32xf32, #tpu.memory_space<vmem>>, vector<64x32xf32>
      %c0_15 = arith.constant 0 : index
      %c0_16 = arith.constant 0 : index
      %18 = vector.load %arg5[%c0_15, %c0_16] : memref<1x32xf32, #tpu.memory_space<vmem>>, vector<1x32xf32>
      %19 = vector.broadcast %18 : vector<1x32xf32> to vector<64x32xf32>
      %20 = arith.addf %17, %19 : vector<64x32xf32>
      %cst_17 = arith.constant 0.000000e+00 : f32
      %21 = vector.broadcast %cst_17 : f32 to vector<64x32xf32>
      %22 = arith.maximumf %20, %21 : vector<64x32xf32>
      %23 = arith.truncf %22 : vector<64x32xf32> to vector<64x32xbf16>
      %c0_18 = arith.constant 0 : index
      %c0_19 = arith.constant 0 : index
      %24 = vector.load %arg6[%c0_18, %c0_19] : memref<32x128xbf16, #tpu.memory_space<vmem>>, vector<32x128xbf16>
      %cst_20 = arith.constant dense<0.000000e+00> : vector<64x128xf32>
      %25 = tpu.matmul %23, %24, %cst_20 {dimension_numbers = #tpu.dot_dimension_numbers<[1], [0], [0], [1], [0, 0, 1, 1], [], []>} : vector<64x32xbf16>, vector<32x128xbf16>, vector<64x128xf32> -> vector<64x128xf32>
      %26 = arith.truncf %25 : vector<64x128xf32> to vector<64x128xbf16>
      %c0_21 = arith.constant 0 : index
      %c0_22 = arith.constant 0 : index
      %27 = vector.load %arg7[%c0_21, %c0_22] : memref<64x128xbf16, #tpu.memory_space<vmem>>, vector<64x128xbf16>
      tpu.vector_store %arg7[%c0_21, %c0_22], %26 {strides = array<i32>} : memref<64x128xbf16, #tpu.memory_space<vmem>>, vector<64x128xbf16>,
    } else {
    }
    return
  }
  func.func @transform_0(%arg0: i32, %arg1: i32) -> (i32, i32) {
    %c0_i32 = arith.constant 0 : i32
    return %arg0, %arg1 : i32, i32
  }
  func.func @transform_1(%arg0: i32, %arg1: i32) -> (i32, i32) {
    %c0_i32 = arith.constant 0 : i32
    %c0_i32_0 = arith.constant 0 : i32
    return %arg1, %c0_i32 : i32, i32
  }
  func.func @transform_2(%arg0: i32, %arg1: i32) -> (i32, i32) {
    %c0_i32 = arith.constant 0 : i32
    %c0_i32_0 = arith.constant 0 : i32
    %c0_i32_1 = arith.constant 0 : i32
    return %c0_i32, %c0_i32_0 : i32, i32
  }
  func.func @transform_3(%arg0: i32, %arg1: i32) -> (i32, i32) {
    %c0_i32 = arith.constant 0 : i32
    %c0_i32_0 = arith.constant 0 : i32
    %c0_i32_1 = arith.constant 0 : i32
    return %c0_i32, %c0_i32_0 : i32, i32
  }
  func.func @transform_4(%arg0: i32, %arg1: i32) -> (i32, i32) {
    %c0_i32 = arith.constant 0 : i32
    %c0_i32_0 = arith.constant 0 : i32
    %c0_i32_1 = arith.constant 0 : i32
    return %c0_i32, %c0_i32_0 : i32, i32
  }
  func.func @transform_5(%arg0: i32, %arg1: i32) -> (i32, i32) {
    %c0_i32 = arith.constant 0 : i32
    %c0_i32_0 = arith.constant 0 : i32
    return %arg0, %c0_i32 : i32, i32
  }
}

</mosaic_0001>

<llo_original>
// kernel: tpu_custom_call.1
$region0: #{tpu_custom_call.1}
  #allocation0 [shape = 'u32[]', space=smem, size = 0x4, offset = 0x4, fixed_abs, tag = 'smem constant byte address 0x4 - core index']
  #allocation1 [shape = 'u32[72,128]{1,0:T(1,128)}', space=vmem, size = 0x9000, scoped, tag = 'internal scratch']
  #allocation2 [shape = 'f32[64,32]{1,0:T(8,128)}', space=vmem, size = 0x8000, scoped, tag = 'scratch operand']
  %s0 = inlined_call_operand.vmem [shape: f32[128,128], index: 0, kind: input, shape index: {}]
  %s1 = inlined_call_operand.vmem [shape: f32[128,16], index: 1, kind: input, shape index: {}]
  %s2 = inlined_call_operand.hbm [shape: bf16[16,32], index: 2, kind: input, shape index: {}]
  %s3 = inlined_call_operand.vmem [shape: f32[1,32], index: 3, kind: input, shape index: {}]
  %s4 = inlined_call_operand.vmem [shape: bf16[32,128], index: 4, kind: input, shape index: {}]
  %s5 = inlined_call_operand.hbm [shape: bf16[128,128], index: 5, kind: output, shape index: {}]
  %s6 = sld [smem:[#allocation0]]
  $region65: #{tpu_custom_call.1} parent=0
    _
  %s8 = ssub.s32 1, %s6
  %s9 = scalar_select 0, %s8, %s6
  $region1: #{tpu_custom_call.1} parent=0
    #allocation3 [shape = 'u8[4096]{0}', space=vmem, size = 0x1000, scoped, tag = 'input window, operand 2, single buffered']
    #allocation4 [shape = 's32[2]{0}', space=sflag, size = 0x8, scoped, tag = 'scoped memory for tpu_custom_call.1']
    #allocation5 [shape = 's32[2]{0}', space=sflag, size = 0x8, scoped, tag = 'scoped memory for tpu_custom_call.1']
    #allocation6 [shape = 'u8[32768]{0}', space=vmem, size = 0x8000, scoped, tag = 'output window, operand 0']
    %10 = vsyncpa [#allocation4], 0
    %11 = vsyncpa [#allocation5], 0
    %s12 = scalar_lea.sflag [#allocation5], 1
    %13 = vsyncpa %s12, 0
    loop: start=0, step=1, limit=4
    $region2: #{tpu_custom_call.1} parent=1 // loop_pre_header
      _
    $region3: #{tpu_custom_call.1} parent=1 // loop_header
      %s15 = sphi 0, %s19
      %p16 = scmp.ge.s32.totalorder %s15, 4
      %s22 = sphi 0, %s34
      %s23 = sphi 0, %s30
      %s24 = sphi 0, %s22
      %s25 = sphi 0, %s23
      %s26 = sphi 0, %s24
      %s27 = sphi 0, %s25
      %s39 = sphi 0, %s41
      %s42 = sphi 0, %s39
      %s43 = sphi 0, %s42
      %s59 = sphi 0, %s43
      %s65 = sphi 0, %s67
      %s68 = sphi 0, %s65
      %s69 = sphi 0, %s68
      %s85 = sphi 0, %s69
      %s89 = sphi 0, %s89
      %s91 = sphi 0, %s89
      %s92 = sphi 0, %s91
      %s106 = sphi 0, %s92
      %s110 = sphi 0, %s110
      %s112 = sphi 0, %s110
      %s113 = sphi 0, %s112
      %s127 = sphi 0, %s113
      %s131 = sphi 0, %s131
      %s133 = sphi 0, %s131
      %s134 = sphi 0, %s133
      %s148 = sphi 0, %s134
      %s154 = sphi 0, %s156
      %s157 = sphi 0, %s154
      %s158 = sphi 0, %s157
      %s174 = sphi 0, %s158
    $region4: #{tpu_custom_call.1} parent=1 // loop_header_branch
      %18 = sbr.rel (%p16) target = $region8
    $region5: #{tpu_custom_call.1} parent=1 // loop_body
      %s20 = ssub.s32 %s15, 1
      %s21 = ssub.s32 %s15, 2
      %s28 = sadd.s32 1, %s23
      %p29 = scmp.ge.s32.totalorder %s28, 1
      %s30 = scalar_select %p29, 0, %s28
      %s31 = sadd.s32 1, %s22
      %s32 = scalar_select %p29, %s31, %s22
      %p33 = scmp.ge.s32.totalorder %s32, 2
      %s34 = scalar_select %p33, 0, %s32
      %s35 = ssub.s32 %s22, %s34
      %s36 = ssub.s32 %s23, %s30
      %s37 = sor.u32 %s35, %s36
      %p38 = scmp.eq.s32.totalorder %s37, 0
      %s40 = sadd.s32 %s39, 1
      %s41 = scalar_select %p38, %s39, %s40
      %p44 = pneg %p38
      %p45 = scmp.eq.s32.totalorder %s15, 1
      %p46 = por %p44, %p45
      %p47 = scmp.ne.s32.totalorder %s39, %s42
      %p48 = scmp.eq.s32.totalorder %s15, 0
      %p49 = por %p47, %p48
      %p50 = scmp.ne.s32.totalorder %s39, %s42
      %p51 = scmp.eq.s32.totalorder %s20, 1
      %p52 = por %p50, %p51
      %p53 = scmp.ne.s32.totalorder %s42, %s43
      %p54 = scmp.eq.s32.totalorder %s20, 0
      %p55 = por %p53, %p54
      %p56 = scmp.ne.s32.totalorder %s42, %s43
      %p57 = scmp.eq.s32.totalorder %s21, 1
      %p58 = por %p56, %p57
      %p60 = scmp.ne.s32.totalorder %s43, %s59
      %p61 = scmp.eq.s32.totalorder %s21, 0
      %p62 = por %p60, %p61
      %s63 = ssub.s32 %s23, %s30
      %p64 = scmp.eq.s32.totalorder %s63, 0
      %s66 = sadd.s32 %s65, 1
      %s67 = scalar_select %p64, %s65, %s66
      %p70 = pneg %p64
      %p71 = scmp.eq.s32.totalorder %s15, 1
      %p72 = por %p70, %p71
      %p73 = scmp.ne.s32.totalorder %s65, %s68
      %p74 = scmp.eq.s32.totalorder %s15, 0
      %p75 = por %p73, %p74
      %p76 = scmp.ne.s32.totalorder %s65, %s68
      %p77 = scmp.eq.s32.totalorder %s20, 1
      %p78 = por %p76, %p77
      %p79 = scmp.ne.s32.totalorder %s68, %s69
      %p80 = scmp.eq.s32.totalorder %s20, 0
      %p81 = por %p79, %p80
      %p82 = scmp.ne.s32.totalorder %s68, %s69
      %p83 = scmp.eq.s32.totalorder %s21, 1
      %p84 = por %p82, %p83
      %p86 = scmp.ne.s32.totalorder %s69, %s85
      %p87 = scmp.eq.s32.totalorder %s21, 0
      %p88 = por %p86, %p87
      %s90 = sadd.s32 %s89, 1
      %p93 = scmp.eq.s32.totalorder %s15, 1
      %p94 = scmp.ne.s32.totalorder %s89, %s91
      %p95 = scmp.eq.s32.totalorder %s15, 0
      %p96 = por %p94, %p95
      %p97 = scmp.ne.s32.totalorder %s89, %s91
      %p98 = scmp.eq.s32.totalorder %s20, 1
      %p99 = por %p97, %p98
      %p100 = scmp.ne.s32.totalorder %s91, %s92
      %p101 = scmp.eq.s32.totalorder %s20, 0
      %p102 = por %p100, %p101
      %p103 = scmp.ne.s32.totalorder %s91, %s92
      %p104 = scmp.eq.s32.totalorder %s21, 1
      %p105 = por %p103, %p104
      %p107 = scmp.ne.s32.totalorder %s92, %s106
      %p108 = scmp.eq.s32.totalorder %s21, 0
      %p109 = por %p107, %p108
      %s111 = sadd.s32 %s110, 1
      %p114 = scmp.eq.s32.totalorder %s15, 1
      %p115 = scmp.ne.s32.totalorder %s110, %s112
      %p116 = scmp.eq.s32.totalorder %s15, 0
      %p117 = por %p115, %p116
      %p118 = scmp.ne.s32.totalorder %s110, %s112
      %p119 = scmp.eq.s32.totalorder %s20, 1
      %p120 = por %p118, %p119
      %p121 = scmp.ne.s32.totalorder %s112, %s113
      %p122 = scmp.eq.s32.totalorder %s20, 0
      %p123 = por %p121, %p122
      %p124 = scmp.ne.s32.totalorder %s112, %s113
      %p125 = scmp.eq.s32.totalorder %s21, 1
      %p126 = por %p124, %p125
      %p128 = scmp.ne.s32.totalorder %s113, %s127
      %p129 = scmp.eq.s32.totalorder %s21, 0
      %p130 = por %p128, %p129
      %s132 = sadd.s32 %s131, 1
      %p135 = scmp.eq.s32.totalorder %s15, 1
      %p136 = scmp.ne.s32.totalorder %s131, %s133
      %p137 = scmp.eq.s32.totalorder %s15, 0
      %p138 = por %p136, %p137
      %p139 = scmp.ne.s32.totalorder %s131, %s133
      %p140 = scmp.eq.s32.totalorder %s20, 1
      %p141 = por %p139, %p140
      %p142 = scmp.ne.s32.totalorder %s133, %s134
      %p143 = scmp.eq.s32.totalorder %s20, 0
      %p144 = por %p142, %p143
      %p145 = scmp.ne.s32.totalorder %s133, %s134
      %p146 = scmp.eq.s32.totalorder %s21, 1
      %p147 = por %p145, %p146
      %p149 = scmp.ne.s32.totalorder %s134, %s148
      %p150 = scmp.eq.s32.totalorder %s21, 0
      %p151 = por %p149, %p150
      %s152 = ssub.s32 %s22, %s34
      %p153 = scmp.eq.s32.totalorder %s152, 0
      %s155 = sadd.s32 %s154, 1
      %s156 = scalar_select %p153, %s154, %s155
      %p159 = pneg %p153
      %p160 = scmp.eq.s32.totalorder %s15, 1
      %p161 = por %p159, %p160
      %p162 = scmp.ne.s32.totalorder %s154, %s157
      %p163 = scmp.eq.s32.totalorder %s15, 0
      %p164 = por %p162, %p163
      %p165 = scmp.ne.s32.totalorder %s154, %s157
      %p166 = scmp.eq.s32.totalorder %s20, 1
      %p167 = por %p165, %p166
      %p168 = scmp.ne.s32.totalorder %s157, %s158
      %p169 = scmp.eq.s32.totalorder %s20, 0
      %p170 = por %p168, %p169
      %p171 = scmp.ne.s32.totalorder %s157, %s158
      %p172 = scmp.eq.s32.totalorder %s21, 1
      %p173 = por %p171, %p172
      %p175 = scmp.ne.s32.totalorder %s158, %s174
      %p176 = scmp.eq.s32.totalorder %s21, 0
      %p177 = por %p175, %p176
      %p178 = scmp.le.s32.totalorder 1, %s15
      %p179 = scmp.lt.s32.totalorder %s15, 3
      %p180 = pnand %p178, %p179
      %p181 = pneg %p180
      // Predicated region
      $region9: #{tpu_custom_call.1} parent=5 // pred_check
        _
      $region10: #{tpu_custom_call.1} parent=5 // pred_check_branch
        %183 = sbr.rel (%p180) target = $region12
      $region11: #{tpu_custom_call.1} parent=5 // pred_region
        %s184 = ssub.s32 %s15, 1
        // Predicated region
        $region13: #{tpu_custom_call.1} parent=11 // pred_check
          %p185 = pneg %p81
        $region14: #{tpu_custom_call.1} parent=11 // pred_check_branch
          %187 = sbr.rel (%p185) target = $region16
        $region15: #{tpu_custom_call.1} parent=11 // pred_region
          %s188 = smul.u32 16, %s25
          %p189 = scmp.lt.s32.totalorder %s188, 15
          %s190 = scalar_select %p189, %s188, 15
          %s191 = smul.addr %s190, 8
          %s192 = scalar_lea.vmem %s1, %s191
          %s193 = smul.u32 16, %s25
        $region16: #{tpu_custom_call.1} parent=11 // pred_fallthru
          _
        // Predicated region
        $region17: #{tpu_custom_call.1} parent=11 // pred_check
          %p194 = pneg %p102
        $region18: #{tpu_custom_call.1} parent=11 // pred_check_branch
          %196 = sbr.rel (%p194) target = $region20
        $region19: #{tpu_custom_call.1} parent=11 // pred_region
          %198 = vsyncadd [#allocation4], 0
          %s199 = sshll.u32 %s2, 4
          %s200 = int_to_ptr.hbm [resolvable:$true] %s199
          %s201 = sshll.u32 [#allocation3], 4
          %s202 = int_to_ptr.vmem [resolvable:$true] %s201
          %207 = dma.hbm_to_vmem [thread:$0]  %s200, 128, %s202, [#allocation4], 64, 64, 4
        $region20: #{tpu_custom_call.1} parent=11 // pred_fallthru
          _
        // Predicated region
        $region21: #{tpu_custom_call.1} parent=11 // pred_check
          %p208 = pneg %p123
        $region22: #{tpu_custom_call.1} parent=11 // pred_check_branch
          %210 = sbr.rel (%p208) target = $region24
        $region23: #{tpu_custom_call.1} parent=11 // pred_region
          _
        $region24: #{tpu_custom_call.1} parent=11 // pred_fallthru
          _
        // Predicated region
        $region25: #{tpu_custom_call.1} parent=11 // pred_check
          %p211 = pneg %p144
        $region26: #{tpu_custom_call.1} parent=11 // pred_check_branch
          %213 = sbr.rel (%p211) target = $region28
        $region27: #{tpu_custom_call.1} parent=11 // pred_region
          _
        $region28: #{tpu_custom_call.1} parent=11 // pred_fallthru
          _
      $region12: #{tpu_custom_call.1} parent=5 // pred_fallthru
        _
      %p214 = scmp.lt.s32.totalorder %s15, 2
      // Predicated region
      $region29: #{tpu_custom_call.1} parent=5 // pred_check
        %p215 = pneg %p214
      $region30: #{tpu_custom_call.1} parent=5 // pred_check_branch
        %217 = sbr.rel (%p215) target = $region32
      $region31: #{tpu_custom_call.1} parent=5 // pred_region
        // Predicated region
        $region33: #{tpu_custom_call.1} parent=31 // pred_check
          %p218 = pneg %p49
        $region34: #{tpu_custom_call.1} parent=31 // pred_check_branch
          %220 = sbr.rel (%p218) target = $region36
        $region35: #{tpu_custom_call.1} parent=31 // pred_region
          %s221 = smul.u32 8, %s22
          %p222 = scmp.lt.s32.totalorder %s221, 15
          %s223 = scalar_select %p222, %s221, 15
          %p224 = scmp.lt.s32.totalorder %s23, 0
          %s225 = scalar_select %p224, %s23, 0
          %s226 = sadd.s32 %s225, %s223
          %s227 = smul.addr %s226, 8
          %s228 = scalar_lea.vmem %s0, %s227
          %s229 = smul.u32 8, %s22
        $region36: #{tpu_custom_call.1} parent=31 // pred_fallthru
          _
      $region32: #{tpu_custom_call.1} parent=5 // pred_fallthru
        _
      %p230 = scmp.le.s32.totalorder 1, %s15
      %p231 = scmp.lt.s32.totalorder %s15, 3
      %p232 = pnand %p230, %p231
      %p233 = pneg %p232
      // Predicated region
      $region37: #{tpu_custom_call.1} parent=5 // pred_check
        _
      $region38: #{tpu_custom_call.1} parent=5 // pred_check_branch
        %235 = sbr.rel (%p232) target = $region40
      $region39: #{tpu_custom_call.1} parent=5 // pred_region
        %s236 = ssub.s32 %s15, 1
        // Predicated region
        $region41: #{tpu_custom_call.1} parent=39 // pred_check
          %p237 = pneg %p102
        $region42: #{tpu_custom_call.1} parent=39 // pred_check_branch
          %239 = sbr.rel (%p237) target = $region44
        $region43: #{tpu_custom_call.1} parent=39 // pred_region
          %241 = dma.done [#allocation4], 128
        $region44: #{tpu_custom_call.1} parent=39 // pred_fallthru
          _
        %s242 = smul.u32 8, %s24
        %p243 = scmp.lt.s32.totalorder %s242, 15
        %s244 = scalar_select %p243, %s242, 15
        %p245 = scmp.lt.s32.totalorder %s25, 0
        %s246 = scalar_select %p245, %s25, 0
        %s247 = sadd.s32 %s246, %s244
        %s248 = smul.addr %s247, 8
        %s249 = scalar_lea.vmem %s0, %s248
        %p250 = pneg %p55
        %p251 = pneg %p52
        %s252 = smul.u32 16, %s25
        %p253 = scmp.lt.s32.totalorder %s252, 15
        %s254 = scalar_select %p253, %s252, 15
        %s255 = smul.addr %s254, 8
        %s256 = scalar_lea.vmem %s1, %s255
        %p257 = pneg %p81
        %p258 = pneg %p78
        %p259 = pneg %p102
        %p260 = pneg %p99
        %p261 = pneg %p123
        %p262 = pneg %p120
        %p263 = pneg %p144
        %p264 = pneg %p141
        %p265 = pneg %p170
        %p266 = pneg %p167
        %s267 = sand.u32 %s157, 1
        %s268 = scalar_lea.sflag [#allocation5], %s267
        %s269 = sand.u32 %s157, 1
        %s270 = smul.addr %s269, 32
        %s271 = scalar_lea.vmem [#allocation6], %s270
        %s272 = smul.u32 8, %s24
        %p273 = scmp.lt.s32.totalorder %s272, 15
        %s274 = scalar_select %p273, %s272, 15
        %p275 = scmp.lt.s32.totalorder %s25, 0
        %s276 = scalar_select %p275, %s25, 0
        %s277 = sadd.s32 %s276, %s274
        %s278 = smul.addr %s277, 8
        %s279 = scalar_lea.vmem %s0, %s278
        %s280 = smul.u32 8, %s24
        %s281 = smul.u32 16, %s25
        %p282 = scmp.lt.s32.totalorder %s281, 15
        %s283 = scalar_select %p282, %s281, 15
        %s284 = smul.addr %s283, 8
        %s285 = scalar_lea.vmem %s1, %s284
        %s286 = smul.u32 16, %s25
        %s287 = smul.u32 8, %s24
        %p289 = scmp.eq.s32.totalorder %s25, 0
        // Predicated region
        $region45: #{tpu_custom_call.1} parent=39 // pred_check
          %p290 = pneg %p289
        $region46: #{tpu_custom_call.1} parent=39 // pred_check_branch
          %292 = sbr.rel (%p290) target = $region48
        $region47: #{tpu_custom_call.1} parent=39 // pred_region
          %vm293 = vcmask 261120
          %294 = vst.msk [vmem:[#allocation2] sm:$0xff] %vm293, 0.0
          %295 = vst.msk [vmem:[#allocation2 + $0x8] sm:$0xff] %vm293, 0.0
          %296 = vst.msk [vmem:[#allocation2 + $0x10] sm:$0xff] %vm293, 0.0
          %297 = vst.msk [vmem:[#allocation2 + $0x18] sm:$0xff] %vm293, 0.0
          %298 = vst.msk [vmem:[#allocation2 + $0x20] sm:$0xff] %vm293, 0.0
          %299 = vst.msk [vmem:[#allocation2 + $0x28] sm:$0xff] %vm293, 0.0
          %300 = vst.msk [vmem:[#allocation2 + $0x30] sm:$0xff] %vm293, 0.0
          %301 = vst.msk [vmem:[#allocation2 + $0x38] sm:$0xff] %vm293, 0.0
        $region48: #{tpu_custom_call.1} parent=39 // pred_fallthru
          _
        %v302 = vld [vmem:[%s285] sm:$0xff]
        %v303 = vld [vmem:[%s285 + $0x8] sm:$0xff]
        %v304 = vld [vmem:[%s285 + $0x10] sm:$0xff]
        %v305 = vld [vmem:[%s285 + $0x18] sm:$0xff]
        %v306 = vld [vmem:[%s285 + $0x20] sm:$0xff]
        %v307 = vld [vmem:[%s285 + $0x28] sm:$0xff]
        %v308 = vld [vmem:[%s285 + $0x30] sm:$0xff]
        %v309 = vld [vmem:[%s285 + $0x38] sm:$0xff]
        %v310 = vld [vmem:[%s285 + $0x40] sm:$0xff]
        %v311 = vld [vmem:[%s285 + $0x48] sm:$0xff]
        %v312 = vld [vmem:[%s285 + $0x50] sm:$0xff]
        %v313 = vld [vmem:[%s285 + $0x58] sm:$0xff]
        %v314 = vld [vmem:[%s285 + $0x60] sm:$0xff]
        %v315 = vld [vmem:[%s285 + $0x68] sm:$0xff]
        %v316 = vld [vmem:[%s285 + $0x70] sm:$0xff]
        %v317 = vld [vmem:[%s285 + $0x78] sm:$0xff]
        %v318 = vpack.c.bf16 %v303, %v302
        %v319 = vpack.c.bf16 %v305, %v304
        %v320 = vpack.c.bf16 %v307, %v306
        %v321 = vpack.c.bf16 %v309, %v308
        %v322 = vpack.c.bf16 %v311, %v310
        %v323 = vpack.c.bf16 %v313, %v312
        %v324 = vpack.c.bf16 %v315, %v314
        %v325 = vpack.c.bf16 %v317, %v316
        %v326 = vld [vmem:[#allocation3] sm:$0xf]
        %v327 = vld [vmem:[#allocation3 + $0x4] sm:$0xf]
        %v330 = vunpack.c.l.b16 %v326
        %v331 = vunpack.c.l.b16 %v327
        %v332 = vpack.c.b16 %v331, %v330
        %vm334 = vcmask 130048
        %v336 = vsel %vm334, %v318, 0
        %v339 = vsel %vm334, %v319, 0
        %v342 = vsel %vm334, %v320, 0
        %v345 = vsel %vm334, %v321, 0
        %v348 = vsel %vm334, %v322, 0
        %v351 = vsel %vm334, %v323, 0
        %v354 = vsel %vm334, %v324, 0
        %v357 = vsel %vm334, %v325, 0
        %359 = vmatpush.bf16.msra.mxu0 0
        %360 = vmatpush.bf16.msra.mxu0 0
        %361 = vmatpush.bf16.msra.mxu0 0
        %362 = vmatpush.bf16.msra.mxu0 0
        %363 = vmatpush.bf16.msra.mxu0 0
        %364 = vmatpush.bf16.msra.mxu0 0
        %365 = vmatpush.bf16.msra.mxu0 0
        %366 = vmatpush.bf16.msra.mxu0 %v332
        %367 = vmatmul.bf16.gmra.mxu0 %v336
        %v368 = vpop.f32.mrf.mxu0
        %v369 = vadd.f32 0.0, %v368
        %v370 = vpop.f32.mrf.mxu0
        %v371 = vadd.f32 0.0, %v370
        %372 = vmatmul.bf16.gmra.mxu0 %v339
        %v373 = vpop.f32.mrf.mxu0
        %v374 = vadd.f32 0.0, %v373
        %v375 = vpop.f32.mrf.mxu0
        %v376 = vadd.f32 0.0, %v375
        %377 = vmatmul.bf16.gmra.mxu0 %v342
        %v378 = vpop.f32.mrf.mxu0
        %v379 = vadd.f32 0.0, %v378
        %v380 = vpop.f32.mrf.mxu0
        %v381 = vadd.f32 0.0, %v380
        %382 = vmatmul.bf16.gmra.mxu0 %v345
        %v383 = vpop.f32.mrf.mxu0
        %v384 = vadd.f32 0.0, %v383
        %v385 = vpop.f32.mrf.mxu0
        %v386 = vadd.f32 0.0, %v385
        %387 = vmatmul.bf16.gmra.mxu0 %v348
        %v388 = vpop.f32.mrf.mxu0
        %v389 = vadd.f32 0.0, %v388
        %v390 = vpop.f32.mrf.mxu0
        %v391 = vadd.f32 0.0, %v390
        %392 = vmatmul.bf16.gmra.mxu0 %v351
        %v393 = vpop.f32.mrf.mxu0
        %v394 = vadd.f32 0.0, %v393
        %v395 = vpop.f32.mrf.mxu0
        %v396 = vadd.f32 0.0, %v395
        %397 = vmatmul.bf16.gmra.mxu0 %v354
        %v398 = vpop.f32.mrf.mxu0
        %v399 = vadd.f32 0.0, %v398
        %v400 = vpop.f32.mrf.mxu0
        %v401 = vadd.f32 0.0, %v400
        %402 = vmatmul.bf16.gmra.mxu0 %v357
        %v403 = vpop.f32.mrf.mxu0
        %v404 = vadd.f32 0.0, %v403
        %v405 = vpop.f32.mrf.mxu0
        %v406 = vadd.f32 0.0, %v405
        %407 = vdwg.mxu0
        %v408 = vpack.c.bf16 %v371, %v369
        %v409 = vpack.c.bf16 %v376, %v374
        %v410 = vpack.c.bf16 %v381, %v379
        %v411 = vpack.c.bf16 %v386, %v384
        %v412 = vpack.c.bf16 %v391, %v389
        %v413 = vpack.c.bf16 %v396, %v394
        %v414 = vpack.c.bf16 %v401, %v399
        %v415 = vpack.c.bf16 %v406, %v404
        %v416 = vld [vmem:[#allocation2] sm:$0xff]
        %v417 = vld [vmem:[#allocation2 + $0x8] sm:$0xff]
        %v418 = vld [vmem:[#allocation2 + $0x10] sm:$0xff]
        %v419 = vld [vmem:[#allocation2 + $0x18] sm:$0xff]
        %v420 = vld [vmem:[#allocation2 + $0x20] sm:$0xff]
        %v421 = vld [vmem:[#allocation2 + $0x28] sm:$0xff]
        %v422 = vld [vmem:[#allocation2 + $0x30] sm:$0xff]
        %v423 = vld [vmem:[#allocation2 + $0x38] sm:$0xff]
        %v424 = vld [vmem:[%s279] sm:$0xff]
        %v425 = vld [vmem:[%s279 + $0x8] sm:$0xff]
        %v426 = vld [vmem:[%s279 + $0x10] sm:$0xff]
        %v427 = vld [vmem:[%s279 + $0x18] sm:$0xff]
        %v428 = vld [vmem:[%s279 + $0x20] sm:$0xff]
        %v429 = vld [vmem:[%s279 + $0x28] sm:$0xff]
        %v430 = vld [vmem:[%s279 + $0x30] sm:$0xff]
        %v431 = vld [vmem:[%s279 + $0x38] sm:$0xff]
        %v432 = vpack.c.bf16 %v425, %v424
        %v433 = vpack.c.bf16 %v427, %v426
        %v434 = vpack.c.bf16 %v429, %v428
        %v435 = vpack.c.bf16 %v431, %v430
        %436 = vmatpush.bf16.msra.mxu0 %v415
        %437 = vmatpush.bf16.msra.mxu0 %v414
        %438 = vmatpush.bf16.msra.mxu0 %v413
        %439 = vmatpush.bf16.msra.mxu0 %v412
        %440 = vmatpush.bf16.msra.mxu0 %v411
        %441 = vmatpush.bf16.msra.mxu0 %v410
        %442 = vmatpush.bf16.msra.mxu0 %v409
        %443 = vmatpush.bf16.msra.mxu0 %v408
        %444 = vmatmul.bf16.gmra.mxu0 %v432
        %v445 = vpop.f32.mrf.mxu0
        %v446 = vadd.f32 0.0, %v445
        %v447 = vpop.f32.mrf.mxu0
        %v448 = vadd.f32 0.0, %v447
        %449 = vmatmul.bf16.gmra.mxu0 %v433
        %v450 = vpop.f32.mrf.mxu0
        %v451 = vadd.f32 0.0, %v450
        %v452 = vpop.f32.mrf.mxu0
        %v453 = vadd.f32 0.0, %v452
        %454 = vmatmul.bf16.gmra.mxu0 %v434
        %v455 = vpop.f32.mrf.mxu0
        %v456 = vadd.f32 0.0, %v455
        %v457 = vpop.f32.mrf.mxu0
        %v458 = vadd.f32 0.0, %v457
        %459 = vmatmul.bf16.gmra.mxu0 %v435
        %v460 = vpop.f32.mrf.mxu0
        %v461 = vadd.f32 0.0, %v460
        %v462 = vpop.f32.mrf.mxu0
        %v463 = vadd.f32 0.0, %v462
        %464 = vdwg.mxu0
        %v465 = vadd.f32 %v416, %v446
        %v466 = vadd.f32 %v417, %v448
        %v467 = vadd.f32 %v418, %v451
        %v468 = vadd.f32 %v419, %v453
        %v469 = vadd.f32 %v420, %v456
        %v470 = vadd.f32 %v421, %v458
        %v471 = vadd.f32 %v422, %v461
        %v472 = vadd.f32 %v423, %v463
        %vm473 = vcmask 261120
        %474 = vst.msk [vmem:[#allocation2] sm:$0xff] %vm473, %v465
        %475 = vst.msk [vmem:[#allocation2 + $0x8] sm:$0xff] %vm473, %v466
        %476 = vst.msk [vmem:[#allocation2 + $0x10] sm:$0xff] %vm473, %v467
        %477 = vst.msk [vmem:[#allocation2 + $0x18] sm:$0xff] %vm473, %v468
        %478 = vst.msk [vmem:[#allocation2 + $0x20] sm:$0xff] %vm473, %v469
        %479 = vst.msk [vmem:[#allocation2 + $0x28] sm:$0xff] %vm473, %v470
        %480 = vst.msk [vmem:[#allocation2 + $0x30] sm:$0xff] %vm473, %v471
        %481 = vst.msk [vmem:[#allocation2 + $0x38] sm:$0xff] %vm473, %v472
        // Predicated region
        $region49: #{tpu_custom_call.1} parent=39 // pred_check
          %p482 = pneg %p289
        $region50: #{tpu_custom_call.1} parent=39 // pred_check_branch
          %484 = sbr.rel (%p482) target = $region52
        $region51: #{tpu_custom_call.1} parent=39 // pred_region
          %v485 = vld [vmem:[#allocation2] sm:$0xff]
          %v486 = vld [vmem:[#allocation2 + $0x8] sm:$0xff]
          %v487 = vld [vmem:[#allocation2 + $0x10] sm:$0xff]
          %v488 = vld [vmem:[#allocation2 + $0x18] sm:$0xff]
          %v489 = vld [vmem:[#allocation2 + $0x20] sm:$0xff]
          %v490 = vld [vmem:[#allocation2 + $0x28] sm:$0xff]
          %v491 = vld [vmem:[#allocation2 + $0x30] sm:$0xff]
          %v492 = vld [vmem:[#allocation2 + $0x38] sm:$0xff]
          %v493 = vld [vmem:[%s3] sm:$0x1]
          %v495 = vperm.slane %v493, 0
          %v497 = vadd.f32 %v485, %v495
          %v498 = vadd.f32 %v486, %v495
          %v499 = vadd.f32 %v487, %v495
          %v500 = vadd.f32 %v488, %v495
          %v501 = vadd.f32 %v489, %v495
          %v502 = vadd.f32 %v490, %v495
          %v503 = vadd.f32 %v491, %v495
          %v504 = vadd.f32 %v492, %v495
          %v505 = vmax.f32 %v497, 0.0
          %v506 = vmax.f32 %v498, 0.0
          %v507 = vmax.f32 %v499, 0.0
          %v508 = vmax.f32 %v500, 0.0
          %v509 = vmax.f32 %v501, 0.0
          %v510 = vmax.f32 %v502, 0.0
          %v511 = vmax.f32 %v503, 0.0
          %v512 = vmax.f32 %v504, 0.0
          %v513 = vpack.c.bf16 %v506, %v505
          %v514 = vpack.c.bf16 %v508, %v507
          %v515 = vpack.c.bf16 %v510, %v509
          %v516 = vpack.c.bf16 %v512, %v511
          %v517 = vld [vmem:[%s4] sm:$0xf]
          %v518 = vld [vmem:[%s4 + $0x4] sm:$0xf]
          %v519 = vld [vmem:[%s4 + $0x8] sm:$0xf]
          %v520 = vld [vmem:[%s4 + $0xc] sm:$0xf]
          %v525 = vunpack.c.l.b16 %v517
          %v526 = vunpack.c.l.b16 %v518
          %v527 = vunpack.c.l.b16 %v519
          %v528 = vunpack.c.l.b16 %v520
          %v529 = vpack.c.b16 %v526, %v525
          %v530 = vpack.c.b16 %v528, %v527
          %v534 = vsel %vm473, %v513, 0
          %v537 = vsel %vm473, %v514, 0
          %v540 = vsel %vm473, %v515, 0
          %v543 = vsel %vm473, %v516, 0
          %545 = vmatpush.bf16.msra.mxu0 0
          %546 = vmatpush.bf16.msra.mxu0 0
          %547 = vmatpush.bf16.msra.mxu0 0
          %548 = vmatpush.bf16.msra.mxu0 0
          %549 = vmatpush.bf16.msra.mxu0 0
          %550 = vmatpush.bf16.msra.mxu0 0
          %551 = vmatpush.bf16.msra.mxu0 %v530
          %552 = vmatpush.bf16.msra.mxu0 %v529
          %553 = vmatmul.bf16.gmra.mxu0 %v534
          %v554 = vpop.f32.mrf.mxu0
          %v555 = vadd.f32 0.0, %v554
          %v556 = vpop.f32.mrf.mxu0
          %v557 = vadd.f32 0.0, %v556
          %558 = vmatmul.bf16.gmra.mxu0 %v537
          %v559 = vpop.f32.mrf.mxu0
          %v560 = vadd.f32 0.0, %v559
          %v561 = vpop.f32.mrf.mxu0
          %v562 = vadd.f32 0.0, %v561
          %563 = vmatmul.bf16.gmra.mxu0 %v540
          %v564 = vpop.f32.mrf.mxu0
          %v565 = vadd.f32 0.0, %v564
          %v566 = vpop.f32.mrf.mxu0
          %v567 = vadd.f32 0.0, %v566
          %568 = vmatmul.bf16.gmra.mxu0 %v543
          %v569 = vpop.f32.mrf.mxu0
          %v570 = vadd.f32 0.0, %v569
          %v571 = vpop.f32.mrf.mxu0
          %v572 = vadd.f32 0.0, %v571
          %573 = vdwg.mxu0
          %v574 = vpack.c.bf16 %v555, %v555
          %v575 = vpack.c.bf16 %v557, %v557
          %v576 = vpack.c.bf16 %v560, %v560
          %v577 = vpack.c.bf16 %v562, %v562
          %v578 = vpack.c.bf16 %v565, %v565
          %v579 = vpack.c.bf16 %v567, %v567
          %v580 = vpack.c.bf16 %v570, %v570
          %v581 = vpack.c.bf16 %v572, %v572
          %582 = vst [vmem:[%s271] sm:$0xf] %v574
          %583 = vst [vmem:[%s271 + $0x4] sm:$0xf] %v575
          %584 = vst [vmem:[%s271 + $0x8] sm:$0xf] %v576
          %585 = vst [vmem:[%s271 + $0xc] sm:$0xf] %v577
          %586 = vst [vmem:[%s271 + $0x10] sm:$0xf] %v578
          %587 = vst [vmem:[%s271 + $0x14] sm:$0xf] %v579
          %588 = vst [vmem:[%s271 + $0x18] sm:$0xf] %v580
          %589 = vst [vmem:[%s271 + $0x1c] sm:$0xf] %v581
        $region52: #{tpu_custom_call.1} parent=39 // pred_fallthru
          _
        %s590 = sand.u32 %s157, 1
        %s591 = scalar_lea.sflag [#allocation5], %s590
        %s592 = sand.u32 %s157, 1
        %s593 = smul.addr %s592, 32
        %s594 = scalar_lea.vmem [#allocation6], %s593
        // Predicated region
        $region53: #{tpu_custom_call.1} parent=39 // pred_check
          %p595 = pneg %p167
        $region54: #{tpu_custom_call.1} parent=39 // pred_check_branch
          %597 = sbr.rel (%p595) target = $region56
        $region55: #{tpu_custom_call.1} parent=39 // pred_region
          %s598 = smul.u32 8, %s24
          %600 = vsyncadd %s591, 0
          %s601 = smul.addr %s598, 4
          %s602 = scalar_lea.hbm %s5, %s601
          %s603 = sshll.u32 %s594, 4
          %s604 = int_to_ptr.vmem [resolvable:$true] %s603
          %s605 = sshll.u32 %s602, 4
          %s606 = int_to_ptr.hbm [resolvable:$true] %s605
          %611 = dma.vmem_to_hbm [thread:$0]  %s604, 512, %s606, %s591, 64, 64, 4
        $region56: #{tpu_custom_call.1} parent=39 // pred_fallthru
          _
      $region40: #{tpu_custom_call.1} parent=5 // pred_fallthru
        _
      %p612 = scmp.le.s32.totalorder 2, %s15
      // Predicated region
      $region57: #{tpu_custom_call.1} parent=5 // pred_check
        %p613 = pneg %p612
      $region58: #{tpu_custom_call.1} parent=5 // pred_check_branch
        %615 = sbr.rel (%p613) target = $region60
      $region59: #{tpu_custom_call.1} parent=5 // pred_region
        %s616 = ssub.s32 %s15, 2
        // Predicated region
        $region61: #{tpu_custom_call.1} parent=59 // pred_check
          %p617 = pneg %p173
        $region62: #{tpu_custom_call.1} parent=59 // pred_check_branch
          %619 = sbr.rel (%p617) target = $region64
        $region63: #{tpu_custom_call.1} parent=59 // pred_region
          %s620 = sand.u32 %s158, 1
          %s621 = scalar_lea.sflag [#allocation5], %s620
          %s622 = sand.u32 %s158, 1
          %s623 = smul.addr %s622, 32
          %s624 = scalar_lea.vmem [#allocation6], %s623
          %626 = dma.done %s621, 512
        $region64: #{tpu_custom_call.1} parent=59 // pred_fallthru
          _
      $region60: #{tpu_custom_call.1} parent=5 // pred_fallthru
        _
    $region6: #{tpu_custom_call.1} parent=1 // loop_footer
      %s19 = sadd.s32 1, %s15
    $region7: #{tpu_custom_call.1} parent=1 // loop_footer_branch
      %14 = sbr.rel target = $region3
    $region8: #{tpu_custom_call.1} parent=1 // loop_exit
      _
    %627 = vsyncpa [#allocation4], 1
    %s628 = scalar_lea.sflag [#allocation4], 1
    %629 = vsyncpa %s628, 1
    %630 = vsyncpa [#allocation5], 1
    %s631 = scalar_lea.sflag [#allocation5], 1
    %632 = vsyncpa %s631, 1

</llo_original>
